<compile_context>
chip_gen: v6e
topology: v6e:2x2x1
jax: 0.10.0
libtpu: 0.0.40
codegen_flags: <defaults>
</compile_context>

<pallas_src>
import functools

import numpy as np
import jax
import jax.numpy as jnp
from jax.experimental import pallas as pl
from jax.experimental.pallas import tpu as pltpu

# -----------------------------------------------------------------------------
# Hyper-parameters (consistent with the M3Gnet module signature)
# -----------------------------------------------------------------------------
NUM_BLOCKS = 2          # num_blocks (default 4; small for the demo)
UNITS = 128             # units      (production default; lane-dense on TPU)
MAX_L = 4               # max_l
MAX_N = 4               # max_n
CUTOFF = 5.0            # cutoff
THREEBODY_CUTOFF = 4.0  # threebody_cutoff
MAX_Z = 94              # max_z
SPHERICAL_DIM = MAX_N * MAX_L

ROW_TILE = 512  # sublane tile for the entity axis (multiple of 8, MXU-friendly)


# -----------------------------------------------------------------------------
# In-kernel helpers
# -----------------------------------------------------------------------------
def _swish(h):
    return h * jax.nn.sigmoid(h)


def _apply_act(h, name):
    if name == "swish":
        return _swish(h)
    if name == "sigmoid":
        return jax.nn.sigmoid(h)
    return h  # None -> identity


def _mxu_dot(x, w):
    """MXU matmul with bf16 operands / f32 accumulation on MXU-friendly shapes.

    Tiny weights (K=4 edge encoder, N=1 energy head) stay in f32; everything
    perf-relevant (K>=16, N multiple of 128) takes the bf16 fast path.
    """
    k, n = int(w.shape[0]), int(w.shape[1])
    if k % 16 == 0 and n % 128 == 0:
        x = x.astype(jnp.bfloat16)
        w = w.astype(jnp.bfloat16)
    return jnp.dot(x, w, preferred_element_type=jnp.float32)


def _chain(h, refs, acts):
    """Apply a chain of Linear(+bias)+activation layers on a row tile."""
    for layer, act in enumerate(acts):
        w = refs[2 * layer][...]
        b = refs[2 * layer + 1][...]
        h = _mxu_dot(h, w) + b
        h = _apply_act(h, act)
    return h


# -----------------------------------------------------------------------------
# Pallas kernels
# -----------------------------------------------------------------------------
def _make_mlp_kernel(acts):
    def kernel(x_ref, *refs):
        o_ref = refs[-1]
        o_ref[...] = _chain(x_ref[...], refs[:-1], acts).astype(o_ref.dtype)
    return kernel


def _tb_update_kernel(x_ref, res_ref, w_ref, b_ref, o_ref):
    """Three-body bond update: out = res + swish(x@Wg+bg) * sigmoid(x@Ws+bs).

    [Wg|Ws] are packed along the output axis -> a single (16, 2U) matmul.
    """
    u = o_ref.shape[-1]
    h = _mxu_dot(x_ref[...], w_ref[...]) + b_ref[...]
    hg = _swish(h[:, :u])
    hs = jax.nn.sigmoid(h[:, u:])
    o_ref[...] = (res_ref[...] + hg * hs).astype(o_ref.dtype)


def _dual_update_kernel(a_src_ref, a_dst_ref, e_ref, rbf_ref,
                        ew1a, ew1b, ew1c, eb1, egw2, egb2, esw2, esb2, erbfw,
                        aw1a, aw1b, aw1c, ab1, agw2, agb2, asw2, asb2, arbfw,
                        e_out_ref, m_out_ref):
    """Fused MainBlock edge update + atom message.

    Both updates compute GatedMLP([a_src|a_dst|e]) * (rbf @ W_rbf); the first
    (3U, 2U) layer is split per input and the g/s branches are packed along
    the output axis (three (U,2U) bf16 matmuls).  The atom message consumes
    the freshly updated edge features in-register (no HBM round-trip), and
    the K=4 RBF gate runs on the VPU as broadcast multiply-adds.
    """
    u = e_out_ref.shape[-1]
    a_src = a_src_ref[...]
    a_dst = a_dst_ref[...]
    e = e_ref[...]
    rbf = rbf_ref[...]                       # (T, MAX_N) f32

    def rbf_gate(w_ref):
        w = w_ref[...]                        # (MAX_N, U) f32
        g = rbf[:, 0:1] * w[0:1, :]
        for k in range(1, w.shape[0]):
            g = g + rbf[:, k:k + 1] * w[k:k + 1, :]
        return g

    def gated(x_e, w1a, w1b, w1c, b1, gw2, gb2, sw2, sb2):
        h = (_mxu_dot(a_src, w1a[...]) + _mxu_dot(a_dst, w1b[...])
             + _mxu_dot(x_e, w1c[...]) + b1[...])
        h = _swish(h)                         # (T, 2U), both branches use swish
        hg = h[:, :u]
        hs = h[:, u:]
        g = _swish(_mxu_dot(hg, gw2[...]) + gb2[...])
        s = jax.nn.sigmoid(_mxu_dot(hs, sw2[...]) + sb2[...])
        return g * s

    # bond (edge) update with residual
    e_new = e + gated(e, ew1a, ew1b, ew1c, eb1, egw2, egb2, esw2, esb2) \
        * rbf_gate(erbfw)
    e_out_ref[...] = e_new.astype(e_out_ref.dtype)
    # atom message uses the post-update edge features (in VMEM / registers)
    msg = gated(e_new, aw1a, aw1b, aw1c, ab1, agw2, agb2, asw2, asb2) \
        * rbf_gate(arbfw)
    m_out_ref[...] = msg.astype(m_out_ref.dtype)


def _make_final_kernel(acts_g, acts_s):
    """Final GatedMLP readout with fused AtomScaling (scale * e + shift)."""
    n_g = 2 * len(acts_g)

    def kernel(x_ref, ss_ref, *refs):
        o_ref = refs[-1]
        wb = refs[:-1]
        x = x_ref[...]
        g = _chain(x, wb[:n_g], acts_g)
        s = _chain(x, wb[n_g:], acts_s)
        e = g * s
        ss = ss_ref[...]
        o_ref[...] = (e * ss[:, 0:1] + ss[:, 1:2]).astype(o_ref.dtype)
    return kernel


# -----------------------------------------------------------------------------
# pallas_call builders (lru-cached on static shape keys)
# -----------------------------------------------------------------------------
def _row_spec(d):
    return pl.BlockSpec((ROW_TILE, d), lambda i: (i, 0))


def _w_spec(a, b):
    return pl.BlockSpec((a, b), lambda i: (0, 0))


def _weight_specs(in_dim, dims):
    specs = []
    d_prev = in_dim
    for d in dims:
        specs.append(_w_spec(d_prev, d))   # weight (fully VMEM resident)
        specs.append(_w_spec(1, d))        # bias
        d_prev = d
    return specs


def _compiler_params():
    # "parallel" lets the 1-D row grid shard across the two v7x TensorCores
    # whenever the bucket-padded row count yields >= 2 tiles.
    return pltpu.CompilerParams(dimension_semantics=("parallel",))


@functools.lru_cache(maxsize=None)
def _mlp_callable(n_rows, in_dim, dims, acts):
    in_specs = [_row_spec(in_dim)] + _weight_specs(in_dim, dims)
    return pl.pallas_call(
        _make_mlp_kernel(acts),
        out_shape=jax.ShapeDtypeStruct((n_rows, dims[-1]), jnp.float32),
        grid=(n_rows // ROW_TILE,),
        in_specs=in_specs,
        out_specs=_row_spec(dims[-1]),
        compiler_params=_compiler_params(),
    )


@functools.lru_cache(maxsize=None)
def _tb_update_callable(n_rows, in_dim, units):
    in_specs = [_row_spec(in_dim), _row_spec(units),
                _w_spec(in_dim, 2 * units), _w_spec(1, 2 * units)]
    return pl.pallas_call(
        _tb_update_kernel,
        out_shape=jax.ShapeDtypeStruct((n_rows, units), jnp.float32),
        grid=(n_rows // ROW_TILE,),
        in_specs=in_specs,
        out_specs=_row_spec(units),
        # residual edge_feat input aliases the output (no extra HBM buffer)
        input_output_aliases={1: 0},
        compiler_params=_compiler_params(),
    )


@functools.lru_cache(maxsize=None)
def _dual_update_callable(n_rows, units, rbf_dim):
    U = units

    def update_weight_specs():
        return [_w_spec(U, 2 * U), _w_spec(U, 2 * U), _w_spec(U, 2 * U),
                _w_spec(1, 2 * U),
                _w_spec(U, U), _w_spec(1, U), _w_spec(U, U), _w_spec(1, U),
                _w_spec(rbf_dim, U)]

    in_specs = [_row_spec(U), _row_spec(U), _row_spec(U), _row_spec(rbf_dim)]
    in_specs += update_weight_specs()   # edge update weights
    in_specs += update_weight_specs()   # atom update weights

    # Advisory cost model: 2 gated updates, each 3x (U,2U) + 2x (U,U) matmuls.
    flops_per_row = 2 * (3 * 2 * U * 2 * U + 2 * 2 * U * U)
    bytes_per_row = 2 * U * 2 + U * 4 + rbf_dim * 4 + 2 * U * 4
    weight_bytes = 2 * (3 * U * 2 * U * 2 + 2 * U * U * 2 + rbf_dim * U * 4
                        + 4 * U * 4)
    cost = pl.CostEstimate(
        flops=n_rows * flops_per_row,
        transcendentals=n_rows * 2 * (2 * U + 2 * U),
        bytes_accessed=n_rows * bytes_per_row + weight_bytes,
    )
    return pl.pallas_call(
        _dual_update_kernel,
        out_shape=(jax.ShapeDtypeStruct((n_rows, U), jnp.float32),   # new edge
                   jax.ShapeDtypeStruct((n_rows, U), jnp.float32)),  # atom msg
        grid=(n_rows // ROW_TILE,),
        in_specs=in_specs,
        out_specs=(_row_spec(U), _row_spec(U)),
        # edge_feat (input index 2) aliases the new edge_feat (output 0)
        input_output_aliases={2: 0},
        compiler_params=_compiler_params(),
        cost_estimate=cost,
    )


@functools.lru_cache(maxsize=None)
def _final_callable(n_rows, in_dim, dims, acts_g, acts_s):
    in_specs = [_row_spec(in_dim), _row_spec(2)]
    in_specs += _weight_specs(in_dim, dims)
    in_specs += _weight_specs(in_dim, dims)
    return pl.pallas_call(
        _make_final_kernel(acts_g, acts_s),
        out_shape=jax.ShapeDtypeStruct((n_rows, dims[-1]), jnp.float32),
        grid=(n_rows // ROW_TILE,),
        in_specs=in_specs,
        out_specs=_row_spec(dims[-1]),
        compiler_params=_compiler_params(),
    )


# -----------------------------------------------------------------------------
# Python wrappers (padding + argument packing)
# -----------------------------------------------------------------------------
def _pad_rows(x):
    """Bucket-pad rows to a power-of-two number of ROW_TILE tiles."""
    n = int(x.shape[0])
    n_tiles = max(1, -(-n // ROW_TILE))
    n_tiles = int(2 ** int(np.ceil(np.log2(n_tiles))))
    n_pad = n_tiles * ROW_TILE
    if n_pad != n:
        x = jnp.pad(x, ((0, n_pad - n), (0, 0)))
    return x, n


def pallas_mlp(x, weights, biases, acts):
    x_p, n = _pad_rows(x)
    dims = tuple(int(w.shape[1]) for w in weights)
    fn = _mlp_callable(int(x_p.shape[0]), int(x.shape[1]), dims, tuple(acts))
    args = [x_p]
    for w, b in zip(weights, biases):
        args += [w, b]
    return fn(*args)[:n]


def pallas_tb_update(x, residual, w_packed, b_packed):
    x_p, n = _pad_rows(x)
    res_p, _ = _pad_rows(residual)
    fn = _tb_update_callable(int(x_p.shape[0]), int(x.shape[1]),
                             int(residual.shape[1]))
    return fn(x_p, res_p, w_packed, b_packed)[:n]


def pallas_dual_update(a_src, a_dst, e, rbf, edge_wb, atom_wb):
    a_src_p, n = _pad_rows(a_src)
    a_dst_p, _ = _pad_rows(a_dst)
    e_p, _ = _pad_rows(e)
    rbf_p, _ = _pad_rows(rbf)
    U = int(e.shape[1])
    fn = _dual_update_callable(int(e_p.shape[0]), U, int(rbf.shape[1]))
    e_new, msg = fn(a_src_p, a_dst_p, e_p, rbf_p, *edge_wb, *atom_wb)
    return e_new[:n], msg[:n]


def pallas_final(x, ss, g_w, g_b, acts_g, s_w, s_b, acts_s):
    x_p, n = _pad_rows(x)
    ss_p, _ = _pad_rows(ss)
    dims = tuple(int(w.shape[1]) for w in g_w)
    fn = _final_callable(int(x_p.shape[0]), int(x.shape[1]), dims,
                         tuple(acts_g), tuple(acts_s))
    args = [x_p, ss_p]
    for w, b in zip(g_w, g_b):
        args += [w, b]
    for w, b in zip(s_w, s_b):
        args += [w, b]
    return fn(*args)[:n]


# -----------------------------------------------------------------------------
# Basis functions (elementwise glue, plain JAX)
# -----------------------------------------------------------------------------
def _sph_jl(l, x, xp):
    """Closed-form spherical Bessel j_l."""
    s, c = xp.sin(x), xp.cos(x)
    if l == 0:
        return s / x
    if l == 1:
        return s / x ** 2 - c / x
    if l == 2:
        return (3.0 / x ** 3 - 1.0 / x) * s - 3.0 / x ** 2 * c
    if l == 3:
        return (15.0 / x ** 4 - 6.0 / x ** 2) * s - (15.0 / x ** 3 - 1.0 / x) * c
    if l == 4:
        return ((105.0 / x ** 5 - 45.0 / x ** 3 + 1.0 / x) * s
                - (105.0 / x ** 4 - 10.0 / x ** 2) * c)
    raise NotImplementedError(l)


# first MAX_N positive roots of j_l for l = 0..3
_SBF_ROOTS = np.array([
    [3.141592653589793, 6.283185307179586, 9.424777960769380, 12.566370614359172],
    [4.493409457909064, 7.725251836937707, 10.904121659428899, 14.066193912831473],
    [5.763459196894550, 9.095011330476355, 12.322940970566582, 15.514603010886749],
    [6.987932000500519, 10.417118547379365, 13.698023153250246, 16.923621285214318],
])
_SBF_NORM = np.array([
    [np.sqrt(2.0 / CUTOFF ** 3) / abs(_sph_jl(l + 1, _SBF_ROOTS[l, n], np))
     for n in range(MAX_N)]
    for l in range(MAX_L)
])

_R_EPS = 1e-6   # guard against r=0 divisions (degenerate / padded entries)
_R_SBF_EPS = 1e-3  # larger guard for j_l (1/x^5 terms) in f32


def smooth_bessel_basis(r):
    """SmoothBesselBasis(r_max=CUTOFF, max_n=MAX_N): smooth radial basis."""
    n = np.arange(MAX_N, dtype=np.float64)
    en = n ** 2 * (n + 2) ** 2 / (4 * (n + 1) ** 4 + 1)
    dn = [1.0]
    for i in range(1, MAX_N):
        dn.append(1 - en[i] / dn[-1])

    coef = ((-1.0) ** n) * np.sqrt(2.0) * np.pi / CUTOFF ** 1.5 \
        * (n + 1) * (n + 2) / np.sqrt((n + 1) ** 2 + (n + 2) ** 2)
    k1 = jnp.asarray((n + 1) * np.pi / CUTOFF, jnp.float32)[None, :]
    k2 = jnp.asarray((n + 2) * np.pi / CUTOFF, jnp.float32)[None, :]
    coef = jnp.asarray(coef, jnp.float32)[None, :]

    r_ = jnp.maximum(r, _R_EPS)[:, None].astype(jnp.float32)

    def sinc(x):
        return jnp.sin(x) / x

    fnr = coef * (sinc(r_ * k1) + sinc(r_ * k2))
    gn = [fnr[:, 0]]
    for i in range(1, MAX_N):
        gn.append((fnr[:, i] + np.sqrt(en[i] / dn[i - 1]) * gn[-1]) / np.sqrt(dn[i]))
    return jnp.stack(gn, axis=1)  # (n_edges, MAX_N)


def spherical_basis(r, theta):
    """SphericalBasisLayer(max_n, max_l, cutoff): j_l(z_ln r / c) * Y_l^0(theta)."""
    # larger clamp here: f32 evaluation of j_l (l>=2) has 1/x^4..1/x^5 terms
    r = jnp.maximum(r, _R_SBF_EPS)
    ct = jnp.cos(theta)
    legendre = [
        jnp.ones_like(ct),
        ct,
        0.5 * (3.0 * ct ** 2 - 1.0),
        0.5 * (5.0 * ct ** 3 - 3.0 * ct),
    ]
    cols = []
    for l in range(MAX_L):
        ylm = np.sqrt((2 * l + 1) / (4.0 * np.pi)) * legendre[l]
        for n in range(MAX_N):
            z = _SBF_ROOTS[l, n]
            rb = _SBF_NORM[l, n] * _sph_jl(l, z * r / CUTOFF, jnp)
            cols.append(rb * ylm)
    return jnp.stack(cols, axis=1)  # (n_triple, MAX_L * MAX_N)


def polynomial_cutoff(r, cutoff):
    ratio = r / cutoff
    f = 1.0 - 6.0 * ratio ** 5 + 15.0 * ratio ** 4 - 10.0 * ratio ** 3
    return jnp.where(r < cutoff, f, 0.0)


# -----------------------------------------------------------------------------
# Parameters (deterministic synthetic init, pre-packed for the fused kernels)
# -----------------------------------------------------------------------------
def init_params(key):
    keys = iter(jax.random.split(key, 64))

    def xavier(shape):
        fan_in, fan_out = shape
        lim = float(np.sqrt(6.0 / (fan_in + fan_out)))
        return jax.random.uniform(next(keys), shape, minval=-lim, maxval=lim,
                                  dtype=jnp.float32)

    def zbias(d):
        return jnp.zeros((1, d), jnp.float32)

    U = UNITS

    def gated_update_pack():
        """GatedMLP(3U -> [U, U]) * MLP(max_n -> U), packed for the dual kernel.

        The (3U, U) first-layer weights of the g/s branches are generated with
        the original fan-in/fan-out, then split per input (src/dst/edge) and
        concatenated along the output axis -> three (U, 2U) bf16 weights.
        """
        g1 = xavier((3 * U, U))
        s1 = xavier((3 * U, U))
        g1b, s1b = zbias(U), zbias(U)
        g2, s2 = xavier((U, U)), xavier((U, U))
        g2b, s2b = zbias(U), zbias(U)
        rbf_w = xavier((MAX_N, U))           # f32: used on the VPU gate path
        w1a = jnp.concatenate([g1[:U], s1[:U]], axis=1).astype(jnp.bfloat16)
        w1b = jnp.concatenate([g1[U:2 * U], s1[U:2 * U]], axis=1).astype(jnp.bfloat16)
        w1c = jnp.concatenate([g1[2 * U:], s1[2 * U:]], axis=1).astype(jnp.bfloat16)
        b1 = jnp.concatenate([g1b, s1b], axis=1)
        return (w1a, w1b, w1c, b1,
                g2.astype(jnp.bfloat16), g2b,
                s2.astype(jnp.bfloat16), s2b,
                rbf_w)

    p = {
        # atom_embedding: MLP(max_z+1 -> units, no bias, no act), uniform(-0.05, 0.05)
        # (applied as an embedding-row gather; identical to one_hot @ W).
        "atom_emb_w": jax.random.uniform(next(keys), (MAX_Z + 1, U),
                                         minval=-0.05, maxval=0.05, dtype=jnp.float32),
        # edge_encoder: MLP(max_n -> units, swish, no bias)
        "edge_enc_w": xavier((MAX_N, U)),
        # final GatedMLP(units -> [units, units, 1], ['swish','swish',None])
        "final_g_w": [xavier((U, U)), xavier((U, U)), xavier((U, 1))],
        "final_g_b": [zbias(U), zbias(U), zbias(1)],
        "final_s_w": [xavier((U, U)), xavier((U, U)), xavier((U, 1))],
        "final_s_b": [zbias(U), zbias(U), zbias(1)],
        # AtomScaling normalizer (identity: scale=1, shift=0 per element)
        "scale": jnp.ones((MAX_Z + 1,), jnp.float32),
        "shift": jnp.zeros((MAX_Z + 1,), jnp.float32),
        "blocks": [],
    }
    for _ in range(NUM_BLOCKS):
        # TODO(synk): MainBlock / ThreeDInteraction / GatedMLP internals are not in the
        # given source; reconstructed from the M3GNet architecture (matgl/mattersim).
        tb_g_w, tb_s_w = xavier((SPHERICAL_DIM, U)), xavier((SPHERICAL_DIM, U))
        b = {
            # three-body interaction (g/s branches packed along the output axis)
            "tb_atom_w": xavier((U, SPHERICAL_DIM)),
            "tb_atom_b": zbias(SPHERICAL_DIM),
            "tb_w": jnp.concatenate([tb_g_w, tb_s_w], axis=1),
            "tb_b": jnp.concatenate([zbias(U), zbias(U)], axis=1),
            # bond (edge) update and atom update (packed + bf16 weights)
            "edge_update": gated_update_pack(),
            "atom_update": gated_update_pack(),
        }
        p["blocks"].append(b)
    return p


# -----------------------------------------------------------------------------
# Forward pass (mirrors M3Gnet.forward)
# -----------------------------------------------------------------------------
def m3gnet_forward(params, inputs):
    pos = inputs["atom_pos"]
    cell = inputs["cell"]
    pbc_offsets = inputs["pbc_offsets"].astype(jnp.float32)
    atom_attr_in = inputs["atom_attr"]
    edge_index = inputs["edge_index"].astype(jnp.int32)
    three_body_indices = inputs["three_body_indices"].astype(jnp.int32)
    num_three_body = inputs["num_three_body"]
    num_bonds = inputs["num_bonds"]
    num_triple_ij = inputs["num_triple_ij"]
    num_atoms = inputs["num_atoms"]
    num_graphs = int(inputs["num_graphs"])
    batch = inputs["batch"]

    n_atoms = pos.shape[0]
    n_edges = edge_index.shape[1]
    n_triple = three_body_indices.shape[0]
    U = UNITS

    # ---- geometry & index bookkeeping (glue) ----
    cumsum = jnp.cumsum(num_bonds) - num_bonds
    index_bias = jnp.repeat(cumsum, num_three_body, total_repeat_length=n_triple)[:, None]
    tbi = three_body_indices + index_bias                       # global bond indices

    atoms_batch = jnp.repeat(jnp.arange(num_graphs), num_atoms, total_repeat_length=n_atoms)
    edge_batch = atoms_batch[edge_index[0]]
    edge_vector = pos[edge_index[0]] - (
        pos[edge_index[1]] + jnp.einsum("bi,bij->bj", pbc_offsets, cell[edge_batch]))
    edge_length = jnp.linalg.norm(edge_vector, axis=1)

    vij = edge_vector[tbi[:, 0]]
    vik = edge_vector[tbi[:, 1]]
    rij = edge_length[tbi[:, 0]]
    rik = edge_length[tbi[:, 1]]
    cos_jik = jnp.sum(vij * vik, axis=1) / jnp.maximum(rij * rik, _R_EPS)
    cos_jik = jnp.clip(cos_jik, -1.0 + 1e-7, 1.0 - 1e-7)
    triple_edge_length = rik

    atomic_numbers = atom_attr_in[:, 0].astype(jnp.int32)

    zb_u = jnp.zeros((1, U), jnp.float32)  # zero-bias for use_bias=False layers

    # ---- embeddings ----
    # atom embedding: one_hot @ W is mathematically a row gather -> pure DMA.
    atom_feat = jnp.take(params["atom_emb_w"], atomic_numbers, axis=0)

    edge_rbf = smooth_bessel_basis(edge_length)                 # (n_edges, MAX_N)
    edge_attr_zero = edge_rbf
    edge_feat = pallas_mlp(edge_rbf, [params["edge_enc_w"]], [zb_u], ("swish",))

    three_basis = spherical_basis(triple_edge_length, jnp.arccos(cos_jik))

    triple_to_edge = jnp.repeat(jnp.arange(n_edges), num_triple_ij,
                                total_repeat_length=n_triple)
    w3 = (polynomial_cutoff(rij, THREEBODY_CUTOFF)
          * polynomial_cutoff(rik, THREEBODY_CUTOFF))[:, None]

    src, dst = edge_index[0], edge_index[1]

    # ---- MainBlock stack ----
    for blk in params["blocks"]:
        # three-body interaction: triples -> bond update (residual fused in-kernel)
        atom_gate = pallas_mlp(atom_feat, [blk["tb_atom_w"]], [blk["tb_atom_b"]],
                               ("sigmoid",))
        end_atom = dst[tbi[:, 1]]
        basis = three_basis * atom_gate[end_atom] * w3
        new_bond = jax.ops.segment_sum(basis, triple_to_edge, num_segments=n_edges)
        edge_feat = pallas_tb_update(new_bond, edge_feat, blk["tb_w"], blk["tb_b"])

        # gathered atom features shared by edge & atom updates (bf16 streaming).
        # TODO(synk): longer term, gather these in-kernel via PrefetchScalarGridSpec
        # scalar-prefetched src/dst indices + manual DMA from HBM-resident atom_feat.
        a_src = atom_feat[src].astype(jnp.bfloat16)
        a_dst = atom_feat[dst].astype(jnp.bfloat16)

        # fused bond (edge) update + atom message (single dual-output kernel;
        # the atom message consumes the post-update edge features in VMEM).
        edge_feat, msg = pallas_dual_update(
            a_src, a_dst, edge_feat, edge_attr_zero,
            blk["edge_update"], blk["atom_update"])
        atom_feat = atom_feat + jax.ops.segment_sum(msg, src, num_segments=n_atoms)

    # ---- readout (AtomScaling scale/shift fused into the kernel) ----
    ss = jnp.stack([params["scale"][atomic_numbers],
                    params["shift"][atomic_numbers]], axis=1)   # (n_atoms, 2)
    energies_i = pallas_final(
        atom_feat, ss,
        params["final_g_w"], params["final_g_b"], ("swish", "swish", None),
        params["final_s_w"], params["final_s_b"], ("swish", "swish", "sigmoid"))[:, 0]
    energies = jax.ops.segment_sum(energies_i, batch, num_segments=num_graphs)
    return energies


# -----------------------------------------------------------------------------
# Deterministic synthetic graph batch (2 graphs: 5 atoms + 4 atoms)
# -----------------------------------------------------------------------------
def build_inputs(key):
    atoms_per_graph = [5, 4]
    n_graphs = len(atoms_per_graph)
    n_atoms = sum(atoms_per_graph)

    k_pos, k_z = jax.random.split(key)
    pos = jax.random.uniform(k_pos, (n_atoms, 3), minval=0.0, maxval=2.5,
                             dtype=jnp.float32)
    atom_attr = jax.random.randint(k_z, (n_atoms, 1), 1, MAX_Z + 1).astype(jnp.float32)

    edges, num_bonds = [], []
    triples, num_three_body, num_triple_ij = [], [], []
    offset = 0
    for n in atoms_per_graph:
        local_edges = [(i, j) for i in range(n) for j in range(n) if i != j]
        num_bonds.append(len(local_edges))
        edges.extend([(i + offset, j + offset) for (i, j) in local_edges])
        n_tb = 0
        for a, (i, _j) in enumerate(local_edges):
            cnt = 0
            for a2, (i2, _k) in enumerate(local_edges):
                if i2 == i and a2 != a:
                    triples.append((a, a2))     # local bond indices (ij, ik)
                    cnt += 1
            num_triple_ij.append(cnt)
            n_tb += cnt
        num_three_body.append(n_tb)
        offset += n

    edge_index = jnp.asarray(np.array(edges, dtype=np.int32).T)          # (2, n_edges)
    three_body_indices = jnp.asarray(np.array(triples, dtype=np.int32))  # (n_triple, 2)
    batch = jnp.asarray(np.repeat(np.arange(n_graphs), atoms_per_graph).astype(np.int32))

    return {
        "atom_pos": pos,
        "cell": jnp.tile(jnp.eye(3, dtype=jnp.float32)[None] * 10.0, (n_graphs, 1, 1)),
        "pbc_offsets": jnp.zeros((edge_index.shape[1], 3), jnp.float32),
        "atom_attr": atom_attr,
        "edge_index": edge_index,
        "three_body_indices": three_body_indices,
        "num_three_body": jnp.asarray(np.array(num_three_body, dtype=np.int32)),
        "num_bonds": jnp.asarray(np.array(num_bonds, dtype=np.int32)),
        "num_triple_ij": jnp.asarray(np.array(num_triple_ij, dtype=np.int32)),
        "num_atoms": jnp.asarray(np.array(atoms_per_graph, dtype=np.int32)),
        "num_graphs": n_graphs,
        "batch": batch,
    }


if __name__ == "__main__":
    key = jax.random.PRNGKey(0)
    k_params, k_data = jax.random.split(key)
    params = init_params(k_params)
    inputs = build_inputs(k_data)

    energies = m3gnet_forward(params, inputs)
    energies = jax.block_until_ready(energies)

    assert energies.shape == (int(inputs["num_graphs"]),)
    assert bool(jnp.all(jnp.isfinite(energies)))
    print("KERNEL_OK")
</pallas_src>

<mosaic_0001>
module attributes {stable_mosaic.version = 11 : i64} {
  func.func @kernel(%arg0: i32, %arg1: memref<512x4xf32, #tpu.memory_space<vmem>>, %arg2: memref<4x128xf32, #tpu.memory_space<vmem>>, %arg3: memref<1x128xf32, #tpu.memory_space<vmem>>, %arg4: memref<512x128xf32, #tpu.memory_space<vmem>>) attributes {dimension_semantics = [#tpu.dimension_semantics<parallel>], iteration_bounds = array<i64: 1>, scalar_prefetch = 0 : i64, scratch_operands = 0 : i64, tpu.core_type = #tpu.core_type<tc>, window_params = [{transform_indices = @transform_0, window_bounds = array<i64: 512, 4>}, {pipeline_mode = #tpu.pipeline_mode<synchronous>, transform_indices = @transform_1, window_bounds = array<i64: 4, 128>}, {pipeline_mode = #tpu.pipeline_mode<synchronous>, transform_indices = @transform_2, window_bounds = array<i64: 1, 128>}, {transform_indices = @transform_3, window_bounds = array<i64: 512, 128>}]} {
    %c0 = arith.constant 0 : index
    %c0_0 = arith.constant 0 : index
    %0 = vector.load %arg1[%c0, %c0_0] : memref<512x4xf32, #tpu.memory_space<vmem>>, vector<512x4xf32>
    %c0_1 = arith.constant 0 : index
    %c0_2 = arith.constant 0 : index
    %1 = vector.load %arg2[%c0_1, %c0_2] : memref<4x128xf32, #tpu.memory_space<vmem>>, vector<4x128xf32>
    %c0_3 = arith.constant 0 : index
    %c0_4 = arith.constant 0 : index
    %2 = vector.load %arg3[%c0_3, %c0_4] : memref<1x128xf32, #tpu.memory_space<vmem>>, vector<1x128xf32>
    %cst = arith.constant dense<0.000000e+00> : vector<512x128xf32>
    %3 = tpu.matmul %0, %1, %cst {dimension_numbers = #tpu.dot_dimension_numbers<[1], [0], [0], [1], [0, 0, 1, 1], [], []>} : vector<512x4xf32>, vector<4x128xf32>, vector<512x128xf32> -> vector<512x128xf32>
    %4 = vector.broadcast %2 : vector<1x128xf32> to vector<512x128xf32>
    %5 = arith.addf %3, %4 : vector<512x128xf32>
    %6 = arith.negf %5 : vector<512x128xf32>
    %7 = math.exp %6 : vector<512x128xf32>
    %cst_5 = arith.constant 1.000000e+00 : f32
    %8 = vector.broadcast %cst_5 : f32 to vector<512x128xf32>
    %9 = arith.addf %8, %7 : vector<512x128xf32>
    %10 = arith.divf %8, %9 : vector<512x128xf32>
    %11 = arith.mulf %5, %10 : vector<512x128xf32>
    %c0_6 = arith.constant 0 : index
    %c0_7 = arith.constant 0 : index
    %12 = vector.load %arg4[%c0_6, %c0_7] : memref<512x128xf32, #tpu.memory_space<vmem>>, vector<512x128xf32>
    tpu.vector_store %arg4[%c0_6, %c0_7], %11 {strides = array<i32>} : memref<512x128xf32, #tpu.memory_space<vmem>>, vector<512x128xf32>,
    return
  }
  func.func @transform_0(%arg0: i32) -> (i32, i32) {
    %c0_i32 = arith.constant 0 : i32
    %c0_i32_0 = arith.constant 0 : i32
    return %arg0, %c0_i32 : i32, i32
  }
  func.func @transform_1(%arg0: i32) -> (i32, i32) {
    %c0_i32 = arith.constant 0 : i32
    %c0_i32_0 = arith.constant 0 : i32
    %c0_i32_1 = arith.constant 0 : i32
    return %c0_i32, %c0_i32_0 : i32, i32
  }
  func.func @transform_2(%arg0: i32) -> (i32, i32) {
    %c0_i32 = arith.constant 0 : i32
    %c0_i32_0 = arith.constant 0 : i32
    %c0_i32_1 = arith.constant 0 : i32
    return %c0_i32, %c0_i32_0 : i32, i32
  }
  func.func @transform_3(%arg0: i32) -> (i32, i32) {
    %c0_i32 = arith.constant 0 : i32
    %c0_i32_0 = arith.constant 0 : i32
    return %arg0, %c0_i32 : i32, i32
  }
}

</mosaic_0001>

<llo_original>
// kernel: tpu_custom_call.1
$region0: #{tpu_custom_call.1}
  #allocation0 [shape = 'u32[]', space=smem, size = 0x4, offset = 0x4, fixed_abs, tag = 'smem constant byte address 0x4 - core index']
  #allocation1 [shape = 'u32[144,128]{1,0:T(1,128)}', space=vmem, size = 0x12000, scoped, tag = 'internal scratch']
  %s0 = inlined_call_operand.vmem [shape: f32[512,4], index: 0, kind: input, shape index: {}]
  %s1 = inlined_call_operand.vmem [shape: f32[4,128], index: 1, kind: input, shape index: {}]
  %s2 = inlined_call_operand.vmem [shape: f32[1,128], index: 2, kind: input, shape index: {}]
  %s3 = inlined_call_operand.hbm [shape: f32[512,128], index: 3, kind: output, shape index: {}]
  %s4 = sld [smem:[#allocation0]]
  $region22: #{tpu_custom_call.1} parent=0
    _
  %s6 = ssub.s32 1, %s4
  %s7 = scalar_select 0, %s6, %s4
  $region1: #{tpu_custom_call.1} parent=0
    #allocation2 [shape = 'u8[262144]{0}', space=vmem, size = 0x40000, scoped, tag = 'output window, operand 0, single buffered']
    #allocation3 [shape = 's32[1]{0}', space=sflag, size = 0x4, scoped, tag = 'scoped memory for tpu_custom_call.1']
    %8 = vsyncpa [#allocation3], 0
    // Predicated region
    $region2: #{tpu_custom_call.1} parent=1 // pred_check
      _
    $region3: #{tpu_custom_call.1} parent=1 // pred_check_branch
      %10 = sbr.rel (0) target = $region5
    $region4: #{tpu_custom_call.1} parent=1 // pred_region
      _
    $region5: #{tpu_custom_call.1} parent=1 // pred_fallthru
      _
    // Predicated region
    $region6: #{tpu_custom_call.1} parent=1 // pred_check
      _
    $region7: #{tpu_custom_call.1} parent=1 // pred_check_branch
      %12 = sbr.rel (0) target = $region9
    $region8: #{tpu_custom_call.1} parent=1 // pred_region
      _
    $region9: #{tpu_custom_call.1} parent=1 // pred_fallthru
      _
    // Predicated region
    $region10: #{tpu_custom_call.1} parent=1 // pred_check
      _
    $region11: #{tpu_custom_call.1} parent=1 // pred_check_branch
      %14 = sbr.rel (0) target = $region13
    $region12: #{tpu_custom_call.1} parent=1 // pred_region
      _
    $region13: #{tpu_custom_call.1} parent=1 // pred_fallthru
      _
    %v15 = vld [vmem:[%s0] sm:$0xff]
    %v16 = vld [vmem:[%s0 + $0x8] sm:$0xff]
    %v17 = vld [vmem:[%s0 + $0x10] sm:$0xff]
    %v18 = vld [vmem:[%s0 + $0x18] sm:$0xff]
    %v19 = vld [vmem:[%s0 + $0x20] sm:$0xff]
    %v20 = vld [vmem:[%s0 + $0x28] sm:$0xff]
    %v21 = vld [vmem:[%s0 + $0x30] sm:$0xff]
    %v22 = vld [vmem:[%s0 + $0x38] sm:$0xff]
    %v23 = vld [vmem:[%s0 + $0x40] sm:$0xff]
    %v24 = vld [vmem:[%s0 + $0x48] sm:$0xff]
    %v25 = vld [vmem:[%s0 + $0x50] sm:$0xff]
    %v26 = vld [vmem:[%s0 + $0x58] sm:$0xff]
    %v27 = vld [vmem:[%s0 + $0x60] sm:$0xff]
    %v28 = vld [vmem:[%s0 + $0x68] sm:$0xff]
    %v29 = vld [vmem:[%s0 + $0x70] sm:$0xff]
    %v30 = vld [vmem:[%s0 + $0x78] sm:$0xff]
    %v31 = vld [vmem:[%s0 + $0x80] sm:$0xff]
    %v32 = vld [vmem:[%s0 + $0x88] sm:$0xff]
    %v33 = vld [vmem:[%s0 + $0x90] sm:$0xff]
    %v34 = vld [vmem:[%s0 + $0x98] sm:$0xff]
    %v35 = vld [vmem:[%s0 + $0xa0] sm:$0xff]
    %v36 = vld [vmem:[%s0 + $0xa8] sm:$0xff]
    %v37 = vld [vmem:[%s0 + $0xb0] sm:$0xff]
    %v38 = vld [vmem:[%s0 + $0xb8] sm:$0xff]
    %v39 = vld [vmem:[%s0 + $0xc0] sm:$0xff]
    %v40 = vld [vmem:[%s0 + $0xc8] sm:$0xff]
    %v41 = vld [vmem:[%s0 + $0xd0] sm:$0xff]
    %v42 = vld [vmem:[%s0 + $0xd8] sm:$0xff]
    %v43 = vld [vmem:[%s0 + $0xe0] sm:$0xff]
    %v44 = vld [vmem:[%s0 + $0xe8] sm:$0xff]
    %v45 = vld [vmem:[%s0 + $0xf0] sm:$0xff]
    %v46 = vld [vmem:[%s0 + $0xf8] sm:$0xff]
    %v47 = vld [vmem:[%s0 + $0x100] sm:$0xff]
    %v48 = vld [vmem:[%s0 + $0x108] sm:$0xff]
    %v49 = vld [vmem:[%s0 + $0x110] sm:$0xff]
    %v50 = vld [vmem:[%s0 + $0x118] sm:$0xff]
    %v51 = vld [vmem:[%s0 + $0x120] sm:$0xff]
    %v52 = vld [vmem:[%s0 + $0x128] sm:$0xff]
    %v53 = vld [vmem:[%s0 + $0x130] sm:$0xff]
    %v54 = vld [vmem:[%s0 + $0x138] sm:$0xff]
    %v55 = vld [vmem:[%s0 + $0x140] sm:$0xff]
    %v56 = vld [vmem:[%s0 + $0x148] sm:$0xff]
    %v57 = vld [vmem:[%s0 + $0x150] sm:$0xff]
    %v58 = vld [vmem:[%s0 + $0x158] sm:$0xff]
    %v59 = vld [vmem:[%s0 + $0x160] sm:$0xff]
    %v60 = vld [vmem:[%s0 + $0x168] sm:$0xff]
    %v61 = vld [vmem:[%s0 + $0x170] sm:$0xff]
    %v62 = vld [vmem:[%s0 + $0x178] sm:$0xff]
    %v63 = vld [vmem:[%s0 + $0x180] sm:$0xff]
    %v64 = vld [vmem:[%s0 + $0x188] sm:$0xff]
    %v65 = vld [vmem:[%s0 + $0x190] sm:$0xff]
    %v66 = vld [vmem:[%s0 + $0x198] sm:$0xff]
    %v67 = vld [vmem:[%s0 + $0x1a0] sm:$0xff]
    %v68 = vld [vmem:[%s0 + $0x1a8] sm:$0xff]
    %v69 = vld [vmem:[%s0 + $0x1b0] sm:$0xff]
    %v70 = vld [vmem:[%s0 + $0x1b8] sm:$0xff]
    %v71 = vld [vmem:[%s0 + $0x1c0] sm:$0xff]
    %v72 = vld [vmem:[%s0 + $0x1c8] sm:$0xff]
    %v73 = vld [vmem:[%s0 + $0x1d0] sm:$0xff]
    %v74 = vld [vmem:[%s0 + $0x1d8] sm:$0xff]
    %v75 = vld [vmem:[%s0 + $0x1e0] sm:$0xff]
    %v76 = vld [vmem:[%s0 + $0x1e8] sm:$0xff]
    %v77 = vld [vmem:[%s0 + $0x1f0] sm:$0xff]
    %v78 = vld [vmem:[%s0 + $0x1f8] sm:$0xff]
    %v79 = vld [vmem:[%s1] sm:$0xf]
    %v80 = vld [vmem:[%s2] sm:$0x1]
    %v82 = vlaneseq
    %v83 = vshrl.u32 %v82, 7
    %v84 = vsub.s32 0, %v83
    %v85 = vrot.slane %v80, %v84
    %vm87 = vcmask 31744
    %v89 = vsel %vm87, %v15, 0
    %v92 = vsel %vm87, %v16, 0
    %v95 = vsel %vm87, %v17, 0
    %v98 = vsel %vm87, %v18, 0
    %v101 = vsel %vm87, %v19, 0
    %v104 = vsel %vm87, %v20, 0
    %v107 = vsel %vm87, %v21, 0
    %v110 = vsel %vm87, %v22, 0
    %v113 = vsel %vm87, %v23, 0
    %v116 = vsel %vm87, %v24, 0
    %v119 = vsel %vm87, %v25, 0
    %v122 = vsel %vm87, %v26, 0
    %v125 = vsel %vm87, %v27, 0
    %v128 = vsel %vm87, %v28, 0
    %v131 = vsel %vm87, %v29, 0
    %v134 = vsel %vm87, %v30, 0
    %v137 = vsel %vm87, %v31, 0
    %v140 = vsel %vm87, %v32, 0
    %v143 = vsel %vm87, %v33, 0
    %v146 = vsel %vm87, %v34, 0
    %v149 = vsel %vm87, %v35, 0
    %v152 = vsel %vm87, %v36, 0
    %v155 = vsel %vm87, %v37, 0
    %v158 = vsel %vm87, %v38, 0
    %v161 = vsel %vm87, %v39, 0
    %v164 = vsel %vm87, %v40, 0
    %v167 = vsel %vm87, %v41, 0
    %v170 = vsel %vm87, %v42, 0
    %v173 = vsel %vm87, %v43, 0
    %v176 = vsel %vm87, %v44, 0
    %v179 = vsel %vm87, %v45, 0
    %v182 = vsel %vm87, %v46, 0
    %v185 = vsel %vm87, %v47, 0
    %v188 = vsel %vm87, %v48, 0
    %v191 = vsel %vm87, %v49, 0
    %v194 = vsel %vm87, %v50, 0
    %v197 = vsel %vm87, %v51, 0
    %v200 = vsel %vm87, %v52, 0
    %v203 = vsel %vm87, %v53, 0
    %v206 = vsel %vm87, %v54, 0
    %v209 = vsel %vm87, %v55, 0
    %v212 = vsel %vm87, %v56, 0
    %v215 = vsel %vm87, %v57, 0
    %v218 = vsel %vm87, %v58, 0
    %v221 = vsel %vm87, %v59, 0
    %v224 = vsel %vm87, %v60, 0
    %v227 = vsel %vm87, %v61, 0
    %v230 = vsel %vm87, %v62, 0
    %v233 = vsel %vm87, %v63, 0
    %v236 = vsel %vm87, %v64, 0
    %v239 = vsel %vm87, %v65, 0
    %v242 = vsel %vm87, %v66, 0
    %v245 = vsel %vm87, %v67, 0
    %v248 = vsel %vm87, %v68, 0
    %v251 = vsel %vm87, %v69, 0
    %v254 = vsel %vm87, %v70, 0
    %v257 = vsel %vm87, %v71, 0
    %v260 = vsel %vm87, %v72, 0
    %v263 = vsel %vm87, %v73, 0
    %v266 = vsel %vm87, %v74, 0
    %v269 = vsel %vm87, %v75, 0
    %v272 = vsel %vm87, %v76, 0
    %v275 = vsel %vm87, %v77, 0
    %v278 = vsel %vm87, %v78, 0
    %vm280 = vcmask 1043456
    %v282 = vsel %vm280, %v79, 0
    %284 = vmatprep.subr.mxu0 0.0
    %285 = vmatpush1.msra.mxu0 0.0
    %286 = vmatprep.subr.mxu0 0.0
    %287 = vmatpush1.msra.mxu0 0.0
    %288 = vmatprep.subr.mxu0 0.0
    %289 = vmatpush1.msra.mxu0 0.0
    %290 = vmatprep.subr.mxu0 0.0
    %291 = vmatpush1.msra.mxu0 0.0
    %292 = vmatprep.subr.mxu0 0.0
    %293 = vmatpush1.msra.mxu0 0.0
    %294 = vmatprep.subr.mxu0 0.0
    %295 = vmatpush1.msra.mxu0 0.0
    %296 = vmatprep.subr.mxu0 0.0
    %297 = vmatpush1.msra.mxu0 0.0
    %298 = vmatprep.subr.mxu0 0.0
    %299 = vmatpush1.msra.mxu0 0.0
    %300 = vmatprep.subr.mxu0 0.0
    %301 = vmatpush1.msra.mxu0 0.0
    %302 = vmatprep.subr.mxu0 0.0
    %303 = vmatpush1.msra.mxu0 0.0
    %304 = vmatprep.subr.mxu0 0.0
    %305 = vmatpush1.msra.mxu0 0.0
    %306 = vmatprep.subr.mxu0 0.0
    %307 = vmatpush1.msra.mxu0 0.0
    %308 = vmatprep.subr.mxu0 0.0
    %309 = vmatpush1.msra.mxu0 0.0
    %310 = vmatprep.subr.mxu0 0.0
    %311 = vmatpush1.msra.mxu0 0.0
    %312 = vmatprep.subr.mxu0 0.0
    %313 = vmatpush1.msra.mxu0 0.0
    %314 = vmatprep.subr.mxu0 0.0
    %315 = vmatpush1.msra.mxu0 %v282
    %316 = vmatprep.subr.mxu0 0.0
    %317 = vmatpush2.msra.mxu0 0.0
    %318 = vmatprep.subr.mxu0 0.0
    %319 = vmatpush2.msra.mxu0 0.0
    %320 = vmatprep.subr.mxu0 0.0
    %321 = vmatpush2.msra.mxu0 0.0
    %322 = vmatprep.subr.mxu0 0.0
    %323 = vmatpush2.msra.mxu0 0.0
    %324 = vmatprep.subr.mxu0 0.0
    %325 = vmatpush2.msra.mxu0 0.0
    %326 = vmatprep.subr.mxu0 0.0
    %327 = vmatpush2.msra.mxu0 0.0
    %328 = vmatprep.subr.mxu0 0.0
    %329 = vmatpush2.msra.mxu0 0.0
    %330 = vmatprep.subr.mxu0 0.0
    %331 = vmatpush2.msra.mxu0 0.0
    %332 = vmatprep.subr.mxu0 0.0
    %333 = vmatpush2.msra.mxu0 0.0
    %334 = vmatprep.subr.mxu0 0.0
    %335 = vmatpush2.msra.mxu0 0.0
    %336 = vmatprep.subr.mxu0 0.0
    %337 = vmatpush2.msra.mxu0 0.0
    %338 = vmatprep.subr.mxu0 0.0
    %339 = vmatpush2.msra.mxu0 0.0
    %340 = vmatprep.subr.mxu0 0.0
    %341 = vmatpush2.msra.mxu0 0.0
    %342 = vmatprep.subr.mxu0 0.0
    %343 = vmatpush2.msra.mxu0 0.0
    %344 = vmatprep.subr.mxu0 0.0
    %345 = vmatpush2.msra.mxu0 0.0
    %346 = vmatprep.subr.mxu0 0.0
    %347 = vmatpush2.msra.mxu0 0.0
    %348 = vmatprep.mubr.f32.mxu0 0.0
    %349 = vmatmul.mubr.f32.gmra.mxu0 %v89
    %v350 = vpop.f32.mrf.mxu0
    %v351 = vadd.f32 %v85, %v350
    %v352 = vpop.f32.mrf.mxu0
    %353 = vmatprep.mubr.f32.mxu0 0.0
    %354 = vmatmul.mubr.f32.gmra.mxu0 %v92
    %v355 = vpop.f32.mrf.mxu0
    %v356 = vadd.f32 %v85, %v355
    %v357 = vpop.f32.mrf.mxu0
    %358 = vmatprep.mubr.f32.mxu0 0.0
    %359 = vmatmul.mubr.f32.gmra.mxu0 %v95
    %v360 = vpop.f32.mrf.mxu0
    %v361 = vadd.f32 %v85, %v360
    %v362 = vpop.f32.mrf.mxu0
    %363 = vmatprep.mubr.f32.mxu0 0.0
    %364 = vmatmul.mubr.f32.gmra.mxu0 %v98
    %v365 = vpop.f32.mrf.mxu0
    %v366 = vadd.f32 %v85, %v365
    %v367 = vpop.f32.mrf.mxu0
    %368 = vmatprep.mubr.f32.mxu0 0.0
    %369 = vmatmul.mubr.f32.gmra.mxu0 %v101
    %v370 = vpop.f32.mrf.mxu0
    %v371 = vadd.f32 %v85, %v370
    %v372 = vpop.f32.mrf.mxu0
    %373 = vmatprep.mubr.f32.mxu0 0.0
    %374 = vmatmul.mubr.f32.gmra.mxu0 %v104
    %v375 = vpop.f32.mrf.mxu0
    %v376 = vadd.f32 %v85, %v375
    %v377 = vpop.f32.mrf.mxu0
    %378 = vmatprep.mubr.f32.mxu0 0.0
    %379 = vmatmul.mubr.f32.gmra.mxu0 %v107
    %v380 = vpop.f32.mrf.mxu0
    %v381 = vadd.f32 %v85, %v380
    %v382 = vpop.f32.mrf.mxu0
    %383 = vmatprep.mubr.f32.mxu0 0.0
    %384 = vmatmul.mubr.f32.gmra.mxu0 %v110
    %v385 = vpop.f32.mrf.mxu0
    %v386 = vadd.f32 %v85, %v385
    %v387 = vpop.f32.mrf.mxu0
    %388 = vmatprep.mubr.f32.mxu0 0.0
    %389 = vmatmul.mubr.f32.gmra.mxu0 %v113
    %v390 = vpop.f32.mrf.mxu0
    %v391 = vadd.f32 %v85, %v390
    %v392 = vpop.f32.mrf.mxu0
    %393 = vmatprep.mubr.f32.mxu0 0.0
    %394 = vmatmul.mubr.f32.gmra.mxu0 %v116
    %v395 = vpop.f32.mrf.mxu0
    %v396 = vadd.f32 %v85, %v395
    %v397 = vpop.f32.mrf.mxu0
    %398 = vmatprep.mubr.f32.mxu0 0.0
    %399 = vmatmul.mubr.f32.gmra.mxu0 %v119
    %v400 = vpop.f32.mrf.mxu0
    %v401 = vadd.f32 %v85, %v400
    %v402 = vpop.f32.mrf.mxu0
    %403 = vmatprep.mubr.f32.mxu0 0.0
    %404 = vmatmul.mubr.f32.gmra.mxu0 %v122
    %v405 = vpop.f32.mrf.mxu0
    %v406 = vadd.f32 %v85, %v405
    %v407 = vpop.f32.mrf.mxu0
    %408 = vmatprep.mubr.f32.mxu0 0.0
    %409 = vmatmul.mubr.f32.gmra.mxu0 %v125
    %v410 = vpop.f32.mrf.mxu0
    %v411 = vadd.f32 %v85, %v410
    %v412 = vpop.f32.mrf.mxu0
    %413 = vmatprep.mubr.f32.mxu0 0.0
    %414 = vmatmul.mubr.f32.gmra.mxu0 %v128
    %v415 = vpop.f32.mrf.mxu0
    %v416 = vadd.f32 %v85, %v415
    %v417 = vpop.f32.mrf.mxu0
    %418 = vmatprep.mubr.f32.mxu0 0.0
    %419 = vmatmul.mubr.f32.gmra.mxu0 %v131
    %v420 = vpop.f32.mrf.mxu0
    %v421 = vadd.f32 %v85, %v420
    %v422 = vpop.f32.mrf.mxu0
    %423 = vmatprep.mubr.f32.mxu0 0.0
    %424 = vmatmul.mubr.f32.gmra.mxu0 %v134
    %v425 = vpop.f32.mrf.mxu0
    %v426 = vadd.f32 %v85, %v425
    %v427 = vpop.f32.mrf.mxu0
    %428 = vmatprep.mubr.f32.mxu0 0.0
    %429 = vmatmul.mubr.f32.gmra.mxu0 %v137
    %v430 = vpop.f32.mrf.mxu0
    %v431 = vadd.f32 %v85, %v430
    %v432 = vpop.f32.mrf.mxu0
    %433 = vmatprep.mubr.f32.mxu0 0.0
    %434 = vmatmul.mubr.f32.gmra.mxu0 %v140
    %v435 = vpop.f32.mrf.mxu0
    %v436 = vadd.f32 %v85, %v435
    %v437 = vpop.f32.mrf.mxu0
    %438 = vmatprep.mubr.f32.mxu0 0.0
    %439 = vmatmul.mubr.f32.gmra.mxu0 %v143
    %v440 = vpop.f32.mrf.mxu0
    %v441 = vadd.f32 %v85, %v440
    %v442 = vpop.f32.mrf.mxu0
    %443 = vmatprep.mubr.f32.mxu0 0.0
    %444 = vmatmul.mubr.f32.gmra.mxu0 %v146
    %v445 = vpop.f32.mrf.mxu0
    %v446 = vadd.f32 %v85, %v445
    %v447 = vpop.f32.mrf.mxu0
    %448 = vmatprep.mubr.f32.mxu0 0.0
    %449 = vmatmul.mubr.f32.gmra.mxu0 %v149
    %v450 = vpop.f32.mrf.mxu0
    %v451 = vadd.f32 %v85, %v450
    %v452 = vpop.f32.mrf.mxu0
    %453 = vmatprep.mubr.f32.mxu0 0.0
    %454 = vmatmul.mubr.f32.gmra.mxu0 %v152
    %v455 = vpop.f32.mrf.mxu0
    %v456 = vadd.f32 %v85, %v455
    %v457 = vpop.f32.mrf.mxu0
    %458 = vmatprep.mubr.f32.mxu0 0.0
    %459 = vmatmul.mubr.f32.gmra.mxu0 %v155
    %v460 = vpop.f32.mrf.mxu0
    %v461 = vadd.f32 %v85, %v460
    %v462 = vpop.f32.mrf.mxu0
    %463 = vmatprep.mubr.f32.mxu0 0.0
    %464 = vmatmul.mubr.f32.gmra.mxu0 %v158
    %v465 = vpop.f32.mrf.mxu0
    %v466 = vadd.f32 %v85, %v465
    %v467 = vpop.f32.mrf.mxu0
    %468 = vmatprep.mubr.f32.mxu0 0.0
    %469 = vmatmul.mubr.f32.gmra.mxu0 %v161
    %v470 = vpop.f32.mrf.mxu0
    %v471 = vadd.f32 %v85, %v470
    %v472 = vpop.f32.mrf.mxu0
    %473 = vmatprep.mubr.f32.mxu0 0.0
    %474 = vmatmul.mubr.f32.gmra.mxu0 %v164
    %v475 = vpop.f32.mrf.mxu0
    %v476 = vadd.f32 %v85, %v475
    %v477 = vpop.f32.mrf.mxu0
    %478 = vmatprep.mubr.f32.mxu0 0.0
    %479 = vmatmul.mubr.f32.gmra.mxu0 %v167
    %v480 = vpop.f32.mrf.mxu0
    %v481 = vadd.f32 %v85, %v480
    %v482 = vpop.f32.mrf.mxu0
    %483 = vmatprep.mubr.f32.mxu0 0.0
    %484 = vmatmul.mubr.f32.gmra.mxu0 %v170
    %v485 = vpop.f32.mrf.mxu0
    %v486 = vadd.f32 %v85, %v485
    %v487 = vpop.f32.mrf.mxu0
    %488 = vmatprep.mubr.f32.mxu0 0.0
    %489 = vmatmul.mubr.f32.gmra.mxu0 %v173
    %v490 = vpop.f32.mrf.mxu0
    %v491 = vadd.f32 %v85, %v490
    %v492 = vpop.f32.mrf.mxu0
    %493 = vmatprep.mubr.f32.mxu0 0.0
    %494 = vmatmul.mubr.f32.gmra.mxu0 %v176
    %v495 = vpop.f32.mrf.mxu0
    %v496 = vadd.f32 %v85, %v495
    %v497 = vpop.f32.mrf.mxu0
    %498 = vmatprep.mubr.f32.mxu0 0.0
    %499 = vmatmul.mubr.f32.gmra.mxu0 %v179
    %v500 = vpop.f32.mrf.mxu0
    %v501 = vadd.f32 %v85, %v500
    %v502 = vpop.f32.mrf.mxu0
    %503 = vmatprep.mubr.f32.mxu0 0.0
    %504 = vmatmul.mubr.f32.gmra.mxu0 %v182
    %v505 = vpop.f32.mrf.mxu0
    %v506 = vadd.f32 %v85, %v505
    %v507 = vpop.f32.mrf.mxu0
    %508 = vmatprep.mubr.f32.mxu0 0.0
    %509 = vmatmul.mubr.f32.gmra.mxu0 %v185
    %v510 = vpop.f32.mrf.mxu0
    %v511 = vadd.f32 %v85, %v510
    %v512 = vpop.f32.mrf.mxu0
    %513 = vmatprep.mubr.f32.mxu0 0.0
    %514 = vmatmul.mubr.f32.gmra.mxu0 %v188
    %v515 = vpop.f32.mrf.mxu0
    %v516 = vadd.f32 %v85, %v515
    %v517 = vpop.f32.mrf.mxu0
    %518 = vmatprep.mubr.f32.mxu0 0.0
    %519 = vmatmul.mubr.f32.gmra.mxu0 %v191
    %v520 = vpop.f32.mrf.mxu0
    %v521 = vadd.f32 %v85, %v520
    %v522 = vpop.f32.mrf.mxu0
    %523 = vmatprep.mubr.f32.mxu0 0.0
    %524 = vmatmul.mubr.f32.gmra.mxu0 %v194
    %v525 = vpop.f32.mrf.mxu0
    %v526 = vadd.f32 %v85, %v525
    %v527 = vpop.f32.mrf.mxu0
    %528 = vmatprep.mubr.f32.mxu0 0.0
    %529 = vmatmul.mubr.f32.gmra.mxu0 %v197
    %v530 = vpop.f32.mrf.mxu0
    %v531 = vadd.f32 %v85, %v530
    %v532 = vpop.f32.mrf.mxu0
    %533 = vmatprep.mubr.f32.mxu0 0.0
    %534 = vmatmul.mubr.f32.gmra.mxu0 %v200
    %v535 = vpop.f32.mrf.mxu0
    %v536 = vadd.f32 %v85, %v535
    %v537 = vpop.f32.mrf.mxu0
    %538 = vmatprep.mubr.f32.mxu0 0.0
    %539 = vmatmul.mubr.f32.gmra.mxu0 %v203
    %v540 = vpop.f32.mrf.mxu0
    %v541 = vadd.f32 %v85, %v540
    %v542 = vpop.f32.mrf.mxu0
    %543 = vmatprep.mubr.f32.mxu0 0.0
    %544 = vmatmul.mubr.f32.gmra.mxu0 %v206
    %v545 = vpop.f32.mrf.mxu0
    %v546 = vadd.f32 %v85, %v545
    %v547 = vpop.f32.mrf.mxu0
    %548 = vmatprep.mubr.f32.mxu0 0.0
    %549 = vmatmul.mubr.f32.gmra.mxu0 %v209
    %v550 = vpop.f32.mrf.mxu0
    %v551 = vadd.f32 %v85, %v550
    %v552 = vpop.f32.mrf.mxu0
    %553 = vmatprep.mubr.f32.mxu0 0.0
    %554 = vmatmul.mubr.f32.gmra.mxu0 %v212
    %v555 = vpop.f32.mrf.mxu0
    %v556 = vadd.f32 %v85, %v555
    %v557 = vpop.f32.mrf.mxu0
    %558 = vmatprep.mubr.f32.mxu0 0.0
    %559 = vmatmul.mubr.f32.gmra.mxu0 %v215
    %v560 = vpop.f32.mrf.mxu0
    %v561 = vadd.f32 %v85, %v560
    %v562 = vpop.f32.mrf.mxu0
    %563 = vmatprep.mubr.f32.mxu0 0.0
    %564 = vmatmul.mubr.f32.gmra.mxu0 %v218
    %v565 = vpop.f32.mrf.mxu0
    %v566 = vadd.f32 %v85, %v565
    %v567 = vpop.f32.mrf.mxu0
    %568 = vmatprep.mubr.f32.mxu0 0.0
    %569 = vmatmul.mubr.f32.gmra.mxu0 %v221
    %v570 = vpop.f32.mrf.mxu0
    %v571 = vadd.f32 %v85, %v570
    %v572 = vpop.f32.mrf.mxu0
    %573 = vmatprep.mubr.f32.mxu0 0.0
    %574 = vmatmul.mubr.f32.gmra.mxu0 %v224
    %v575 = vpop.f32.mrf.mxu0
    %v576 = vadd.f32 %v85, %v575
    %v577 = vpop.f32.mrf.mxu0
    %578 = vmatprep.mubr.f32.mxu0 0.0
    %579 = vmatmul.mubr.f32.gmra.mxu0 %v227
    %v580 = vpop.f32.mrf.mxu0
    %v581 = vadd.f32 %v85, %v580
    %v582 = vpop.f32.mrf.mxu0
    %583 = vmatprep.mubr.f32.mxu0 0.0
    %584 = vmatmul.mubr.f32.gmra.mxu0 %v230
    %v585 = vpop.f32.mrf.mxu0
    %v586 = vadd.f32 %v85, %v585
    %v587 = vpop.f32.mrf.mxu0
    %588 = vmatprep.mubr.f32.mxu0 0.0
    %589 = vmatmul.mubr.f32.gmra.mxu0 %v233
    %v590 = vpop.f32.mrf.mxu0
    %v591 = vadd.f32 %v85, %v590
    %v592 = vpop.f32.mrf.mxu0
    %593 = vmatprep.mubr.f32.mxu0 0.0
    %594 = vmatmul.mubr.f32.gmra.mxu0 %v236
    %v595 = vpop.f32.mrf.mxu0
    %v596 = vadd.f32 %v85, %v595
    %v597 = vpop.f32.mrf.mxu0
    %598 = vmatprep.mubr.f32.mxu0 0.0
    %599 = vmatmul.mubr.f32.gmra.mxu0 %v239
    %v600 = vpop.f32.mrf.mxu0
    %v601 = vadd.f32 %v85, %v600
    %v602 = vpop.f32.mrf.mxu0
    %603 = vmatprep.mubr.f32.mxu0 0.0
    %604 = vmatmul.mubr.f32.gmra.mxu0 %v242
    %v605 = vpop.f32.mrf.mxu0
    %v606 = vadd.f32 %v85, %v605
    %v607 = vpop.f32.mrf.mxu0
    %608 = vmatprep.mubr.f32.mxu0 0.0
    %609 = vmatmul.mubr.f32.gmra.mxu0 %v245
    %v610 = vpop.f32.mrf.mxu0
    %v611 = vadd.f32 %v85, %v610
    %v612 = vpop.f32.mrf.mxu0
    %613 = vmatprep.mubr.f32.mxu0 0.0
    %614 = vmatmul.mubr.f32.gmra.mxu0 %v248
    %v615 = vpop.f32.mrf.mxu0
    %v616 = vadd.f32 %v85, %v615
    %v617 = vpop.f32.mrf.mxu0
    %618 = vmatprep.mubr.f32.mxu0 0.0
    %619 = vmatmul.mubr.f32.gmra.mxu0 %v251
    %v620 = vpop.f32.mrf.mxu0
    %v621 = vadd.f32 %v85, %v620
    %v622 = vpop.f32.mrf.mxu0
    %623 = vmatprep.mubr.f32.mxu0 0.0
    %624 = vmatmul.mubr.f32.gmra.mxu0 %v254
    %v625 = vpop.f32.mrf.mxu0
    %v626 = vadd.f32 %v85, %v625
    %v627 = vpop.f32.mrf.mxu0
    %628 = vmatprep.mubr.f32.mxu0 0.0
    %629 = vmatmul.mubr.f32.gmra.mxu0 %v257
    %v630 = vpop.f32.mrf.mxu0
    %v631 = vadd.f32 %v85, %v630
    %v632 = vpop.f32.mrf.mxu0
    %633 = vmatprep.mubr.f32.mxu0 0.0
    %634 = vmatmul.mubr.f32.gmra.mxu0 %v260
    %v635 = vpop.f32.mrf.mxu0
    %v636 = vadd.f32 %v85, %v635
    %v637 = vpop.f32.mrf.mxu0
    %638 = vmatprep.mubr.f32.mxu0 0.0
    %639 = vmatmul.mubr.f32.gmra.mxu0 %v263
    %v640 = vpop.f32.mrf.mxu0
    %v641 = vadd.f32 %v85, %v640
    %v642 = vpop.f32.mrf.mxu0
    %643 = vmatprep.mubr.f32.mxu0 0.0
    %644 = vmatmul.mubr.f32.gmra.mxu0 %v266
    %v645 = vpop.f32.mrf.mxu0
    %v646 = vadd.f32 %v85, %v645
    %v647 = vpop.f32.mrf.mxu0
    %648 = vmatprep.mubr.f32.mxu0 0.0
    %649 = vmatmul.mubr.f32.gmra.mxu0 %v269
    %v650 = vpop.f32.mrf.mxu0
    %v651 = vadd.f32 %v85, %v650
    %v652 = vpop.f32.mrf.mxu0
    %653 = vmatprep.mubr.f32.mxu0 0.0
    %654 = vmatmul.mubr.f32.gmra.mxu0 %v272
    %v655 = vpop.f32.mrf.mxu0
    %v656 = vadd.f32 %v85, %v655
    %v657 = vpop.f32.mrf.mxu0
    %658 = vmatprep.mubr.f32.mxu0 0.0
    %659 = vmatmul.mubr.f32.gmra.mxu0 %v275
    %v660 = vpop.f32.mrf.mxu0
    %v661 = vadd.f32 %v85, %v660
    %v662 = vpop.f32.mrf.mxu0
    %663 = vmatprep.mubr.f32.mxu0 0.0
    %664 = vmatmul.mubr.f32.gmra.mxu0 %v278
    %v665 = vpop.f32.mrf.mxu0
    %v666 = vadd.f32 %v85, %v665
    %v667 = vpop.f32.mrf.mxu0
    %668 = vdwg.mxu0
    %v669 = vxor.u32 %v351, 2147483648
    %v670 = vxor.u32 %v356, 2147483648
    %v671 = vxor.u32 %v361, 2147483648
    %v672 = vxor.u32 %v366, 2147483648
    %v673 = vxor.u32 %v371, 2147483648
    %v674 = vxor.u32 %v376, 2147483648
    %v675 = vxor.u32 %v381, 2147483648
    %v676 = vxor.u32 %v386, 2147483648
    %v677 = vxor.u32 %v391, 2147483648
    %v678 = vxor.u32 %v396, 2147483648
    %v679 = vxor.u32 %v401, 2147483648
    %v680 = vxor.u32 %v406, 2147483648
    %v681 = vxor.u32 %v411, 2147483648
    %v682 = vxor.u32 %v416, 2147483648
    %v683 = vxor.u32 %v421, 2147483648
    %v684 = vxor.u32 %v426, 2147483648
    %v685 = vxor.u32 %v431, 2147483648
    %v686 = vxor.u32 %v436, 2147483648
    %v687 = vxor.u32 %v441, 2147483648
    %v688 = vxor.u32 %v446, 2147483648
    %v689 = vxor.u32 %v451, 2147483648
    %v690 = vxor.u32 %v456, 2147483648
    %v691 = vxor.u32 %v461, 2147483648
    %v692 = vxor.u32 %v466, 2147483648
    %v693 = vxor.u32 %v471, 2147483648
    %v694 = vxor.u32 %v476, 2147483648
    %v695 = vxor.u32 %v481, 2147483648
    %v696 = vxor.u32 %v486, 2147483648
    %v697 = vxor.u32 %v491, 2147483648
    %v698 = vxor.u32 %v496, 2147483648
    %v699 = vxor.u32 %v501, 2147483648
    %v700 = vxor.u32 %v506, 2147483648
    %v701 = vxor.u32 %v511, 2147483648
    %v702 = vxor.u32 %v516, 2147483648
    %v703 = vxor.u32 %v521, 2147483648
    %v704 = vxor.u32 %v526, 2147483648
    %v705 = vxor.u32 %v531, 2147483648
    %v706 = vxor.u32 %v536, 2147483648
    %v707 = vxor.u32 %v541, 2147483648
    %v708 = vxor.u32 %v546, 2147483648
    %v709 = vxor.u32 %v551, 2147483648
    %v710 = vxor.u32 %v556, 2147483648
    %v711 = vxor.u32 %v561, 2147483648
    %v712 = vxor.u32 %v566, 2147483648
    %v713 = vxor.u32 %v571, 2147483648
    %v714 = vxor.u32 %v576, 2147483648
    %v715 = vxor.u32 %v581, 2147483648
    %v716 = vxor.u32 %v586, 2147483648
    %v717 = vxor.u32 %v591, 2147483648
    %v718 = vxor.u32 %v596, 2147483648
    %v719 = vxor.u32 %v601, 2147483648
    %v720 = vxor.u32 %v606, 2147483648
    %v721 = vxor.u32 %v611, 2147483648
    %v722 = vxor.u32 %v616, 2147483648
    %v723 = vxor.u32 %v621, 2147483648
    %v724 = vxor.u32 %v626, 2147483648
    %v725 = vxor.u32 %v631, 2147483648
    %v726 = vxor.u32 %v636, 2147483648
    %v727 = vxor.u32 %v641, 2147483648
    %v728 = vxor.u32 %v646, 2147483648
    %v729 = vxor.u32 %v651, 2147483648
    %v730 = vxor.u32 %v656, 2147483648
    %v731 = vxor.u32 %v661, 2147483648
    %v732 = vxor.u32 %v666, 2147483648
    %v733 = vmul.f32 %v669, 1.442695
    %v734 = vpow.pop %v733
    %v735 = vmul.f32 %v670, 1.442695
    %v736 = vpow.pop %v735
    %v737 = vmul.f32 %v671, 1.442695
    %v738 = vpow.pop %v737
    %v739 = vmul.f32 %v672, 1.442695
    %v740 = vpow.pop %v739
    %v741 = vmul.f32 %v673, 1.442695
    %v742 = vpow.pop %v741
    %v743 = vmul.f32 %v674, 1.442695
    %v744 = vpow.pop %v743
    %v745 = vmul.f32 %v675, 1.442695
    %v746 = vpow.pop %v745
    %v747 = vmul.f32 %v676, 1.442695
    %v748 = vpow.pop %v747
    %v749 = vmul.f32 %v677, 1.442695
    %v750 = vpow.pop %v749
    %v751 = vmul.f32 %v678, 1.442695
    %v752 = vpow.pop %v751
    %v753 = vmul.f32 %v679, 1.442695
    %v754 = vpow.pop %v753
    %v755 = vmul.f32 %v680, 1.442695
    %v756 = vpow.pop %v755
    %v757 = vmul.f32 %v681, 1.442695
    %v758 = vpow.pop %v757
    %v759 = vmul.f32 %v682, 1.442695
    %v760 = vpow.pop %v759
    %v761 = vmul.f32 %v683, 1.442695
    %v762 = vpow.pop %v761
    %v763 = vmul.f32 %v684, 1.442695
    %v764 = vpow.pop %v763
    %v765 = vmul.f32 %v685, 1.442695
    %v766 = vpow.pop %v765
    %v767 = vmul.f32 %v686, 1.442695
    %v768 = vpow.pop %v767
    %v769 = vmul.f32 %v687, 1.442695
    %v770 = vpow.pop %v769
    %v771 = vmul.f32 %v688, 1.442695
    %v772 = vpow.pop %v771
    %v773 = vmul.f32 %v689, 1.442695
    %v774 = vpow.pop %v773
    %v775 = vmul.f32 %v690, 1.442695
    %v776 = vpow.pop %v775
    %v777 = vmul.f32 %v691, 1.442695
    %v778 = vpow.pop %v777
    %v779 = vmul.f32 %v692, 1.442695
    %v780 = vpow.pop %v779
    %v781 = vmul.f32 %v693, 1.442695
    %v782 = vpow.pop %v781
    %v783 = vmul.f32 %v694, 1.442695
    %v784 = vpow.pop %v783
    %v785 = vmul.f32 %v695, 1.442695
    %v786 = vpow.pop %v785
    %v787 = vmul.f32 %v696, 1.442695
    %v788 = vpow.pop %v787
    %v789 = vmul.f32 %v697, 1.442695
    %v790 = vpow.pop %v789
    %v791 = vmul.f32 %v698, 1.442695
    %v792 = vpow.pop %v791
    %v793 = vmul.f32 %v699, 1.442695
    %v794 = vpow.pop %v793
    %v795 = vmul.f32 %v700, 1.442695
    %v796 = vpow.pop %v795
    %v797 = vmul.f32 %v701, 1.442695
    %v798 = vpow.pop %v797
    %v799 = vmul.f32 %v702, 1.442695
    %v800 = vpow.pop %v799
    %v801 = vmul.f32 %v703, 1.442695
    %v802 = vpow.pop %v801
    %v803 = vmul.f32 %v704, 1.442695
    %v804 = vpow.pop %v803
    %v805 = vmul.f32 %v705, 1.442695
    %v806 = vpow.pop %v805
    %v807 = vmul.f32 %v706, 1.442695
    %v808 = vpow.pop %v807
    %v809 = vmul.f32 %v707, 1.442695
    %v810 = vpow.pop %v809
    %v811 = vmul.f32 %v708, 1.442695
    %v812 = vpow.pop %v811
    %v813 = vmul.f32 %v709, 1.442695
    %v814 = vpow.pop %v813
    %v815 = vmul.f32 %v710, 1.442695
    %v816 = vpow.pop %v815
    %v817 = vmul.f32 %v711, 1.442695
    %v818 = vpow.pop %v817
    %v819 = vmul.f32 %v712, 1.442695
    %v820 = vpow.pop %v819
    %v821 = vmul.f32 %v713, 1.442695
    %v822 = vpow.pop %v821
    %v823 = vmul.f32 %v714, 1.442695
    %v824 = vpow.pop %v823
    %v825 = vmul.f32 %v715, 1.442695
    %v826 = vpow.pop %v825
    %v827 = vmul.f32 %v716, 1.442695
    %v828 = vpow.pop %v827
    %v829 = vmul.f32 %v717, 1.442695
    %v830 = vpow.pop %v829
    %v831 = vmul.f32 %v718, 1.442695
    %v832 = vpow.pop %v831
    %v833 = vmul.f32 %v719, 1.442695
    %v834 = vpow.pop %v833
    %v835 = vmul.f32 %v720, 1.442695
    %v836 = vpow.pop %v835
    %v837 = vmul.f32 %v721, 1.442695
    %v838 = vpow.pop %v837
    %v839 = vmul.f32 %v722, 1.442695
    %v840 = vpow.pop %v839
    %v841 = vmul.f32 %v723, 1.442695
    %v842 = vpow.pop %v841
    %v843 = vmul.f32 %v724, 1.442695
    %v844 = vpow.pop %v843
    %v845 = vmul.f32 %v725, 1.442695
    %v846 = vpow.pop %v845
    %v847 = vmul.f32 %v726, 1.442695
    %v848 = vpow.pop %v847
    %v849 = vmul.f32 %v727, 1.442695
    %v850 = vpow.pop %v849
    %v851 = vmul.f32 %v728, 1.442695
    %v852 = vpow.pop %v851
    %v853 = vmul.f32 %v729, 1.442695
    %v854 = vpow.pop %v853
    %v855 = vmul.f32 %v730, 1.442695
    %v856 = vpow.pop %v855
    %v857 = vmul.f32 %v731, 1.442695
    %v858 = vpow.pop %v857
    %v859 = vmul.f32 %v732, 1.442695
    %v860 = vpow.pop %v859
    %v861 = vadd.f32 %v734, 1.0
    %v862 = vadd.f32 %v736, 1.0
    %v863 = vadd.f32 %v738, 1.0
    %v864 = vadd.f32 %v740, 1.0
    %v865 = vadd.f32 %v742, 1.0
    %v866 = vadd.f32 %v744, 1.0
    %v867 = vadd.f32 %v746, 1.0
    %v868 = vadd.f32 %v748, 1.0
    %v869 = vadd.f32 %v750, 1.0
    %v870 = vadd.f32 %v752, 1.0
    %v871 = vadd.f32 %v754, 1.0
    %v872 = vadd.f32 %v756, 1.0
    %v873 = vadd.f32 %v758, 1.0
    %v874 = vadd.f32 %v760, 1.0
    %v875 = vadd.f32 %v762, 1.0
    %v876 = vadd.f32 %v764, 1.0
    %v877 = vadd.f32 %v766, 1.0
    %v878 = vadd.f32 %v768, 1.0
    %v879 = vadd.f32 %v770, 1.0
    %v880 = vadd.f32 %v772, 1.0
    %v881 = vadd.f32 %v774, 1.0
    %v882 = vadd.f32 %v776, 1.0
    %v883 = vadd.f32 %v778, 1.0
    %v884 = vadd.f32 %v780, 1.0
    %v885 = vadd.f32 %v782, 1.0
    %v886 = vadd.f32 %v784, 1.0
    %v887 = vadd.f32 %v786, 1.0
    %v888 = vadd.f32 %v788, 1.0
    %v889 = vadd.f32 %v790, 1.0
    %v890 = vadd.f32 %v792, 1.0
    %v891 = vadd.f32 %v794, 1.0
    %v892 = vadd.f32 %v796, 1.0
    %v893 = vadd.f32 %v798, 1.0
    %v894 = vadd.f32 %v800, 1.0
    %v895 = vadd.f32 %v802, 1.0
    %v896 = vadd.f32 %v804, 1.0
    %v897 = vadd.f32 %v806, 1.0
    %v898 = vadd.f32 %v808, 1.0
    %v899 = vadd.f32 %v810, 1.0
    %v900 = vadd.f32 %v812, 1.0
    %v901 = vadd.f32 %v814, 1.0
    %v902 = vadd.f32 %v816, 1.0
    %v903 = vadd.f32 %v818, 1.0
    %v904 = vadd.f32 %v820, 1.0
    %v905 = vadd.f32 %v822, 1.0
    %v906 = vadd.f32 %v824, 1.0
    %v907 = vadd.f32 %v826, 1.0
    %v908 = vadd.f32 %v828, 1.0
    %v909 = vadd.f32 %v830, 1.0
    %v910 = vadd.f32 %v832, 1.0
    %v911 = vadd.f32 %v834, 1.0
    %v912 = vadd.f32 %v836, 1.0
    %v913 = vadd.f32 %v838, 1.0
    %v914 = vadd.f32 %v840, 1.0
    %v915 = vadd.f32 %v842, 1.0
    %v916 = vadd.f32 %v844, 1.0
    %v917 = vadd.f32 %v846, 1.0
    %v918 = vadd.f32 %v848, 1.0
    %v919 = vadd.f32 %v850, 1.0
    %v920 = vadd.f32 %v852, 1.0
    %v921 = vadd.f32 %v854, 1.0
    %v922 = vadd.f32 %v856, 1.0
    %v923 = vadd.f32 %v858, 1.0
    %v924 = vadd.f32 %v860, 1.0
    %v925 = vrcp.pop %v861
    %v926 = vmul.f32 1.0, %v925
    %v927 = vrcp.pop %v862
    %v928 = vmul.f32 1.0, %v927
    %v929 = vrcp.pop %v863
    %v930 = vmul.f32 1.0, %v929
    %v931 = vrcp.pop %v864
    %v932 = vmul.f32 1.0, %v931
    %v933 = vrcp.pop %v865
    %v934 = vmul.f32 1.0, %v933
    %v935 = vrcp.pop %v866
    %v936 = vmul.f32 1.0, %v935
    %v937 = vrcp.pop %v867
    %v938 = vmul.f32 1.0, %v937
    %v939 = vrcp.pop %v868
    %v940 = vmul.f32 1.0, %v939
    %v941 = vrcp.pop %v869
    %v942 = vmul.f32 1.0, %v941
    %v943 = vrcp.pop %v870
    %v944 = vmul.f32 1.0, %v943
    %v945 = vrcp.pop %v871
    %v946 = vmul.f32 1.0, %v945
    %v947 = vrcp.pop %v872
    %v948 = vmul.f32 1.0, %v947
    %v949 = vrcp.pop %v873
    %v950 = vmul.f32 1.0, %v949
    %v951 = vrcp.pop %v874
    %v952 = vmul.f32 1.0, %v951
    %v953 = vrcp.pop %v875
    %v954 = vmul.f32 1.0, %v953
    %v955 = vrcp.pop %v876
    %v956 = vmul.f32 1.0, %v955
    %v957 = vrcp.pop %v877
    %v958 = vmul.f32 1.0, %v957
    %v959 = vrcp.pop %v878
    %v960 = vmul.f32 1.0, %v959
    %v961 = vrcp.pop %v879
    %v962 = vmul.f32 1.0, %v961
    %v963 = vrcp.pop %v880
    %v964 = vmul.f32 1.0, %v963
    %v965 = vrcp.pop %v881
    %v966 = vmul.f32 1.0, %v965
    %v967 = vrcp.pop %v882
    %v968 = vmul.f32 1.0, %v967
    %v969 = vrcp.pop %v883
    %v970 = vmul.f32 1.0, %v969
    %v971 = vrcp.pop %v884
    %v972 = vmul.f32 1.0, %v971
    %v973 = vrcp.pop %v885
    %v974 = vmul.f32 1.0, %v973
    %v975 = vrcp.pop %v886
    %v976 = vmul.f32 1.0, %v975
    %v977 = vrcp.pop %v887
    %v978 = vmul.f32 1.0, %v977
    %v979 = vrcp.pop %v888
    %v980 = vmul.f32 1.0, %v979
    %v981 = vrcp.pop %v889
    %v982 = vmul.f32 1.0, %v981
    %v983 = vrcp.pop %v890
    %v984 = vmul.f32 1.0, %v983
    %v985 = vrcp.pop %v891
    %v986 = vmul.f32 1.0, %v985
    %v987 = vrcp.pop %v892
    %v988 = vmul.f32 1.0, %v987
    %v989 = vrcp.pop %v893
    %v990 = vmul.f32 1.0, %v989
    %v991 = vrcp.pop %v894
    %v992 = vmul.f32 1.0, %v991
    %v993 = vrcp.pop %v895
    %v994 = vmul.f32 1.0, %v993
    %v995 = vrcp.pop %v896
    %v996 = vmul.f32 1.0, %v995
    %v997 = vrcp.pop %v897
    %v998 = vmul.f32 1.0, %v997
    %v999 = vrcp.pop %v898
    %v1000 = vmul.f32 1.0, %v999
    %v1001 = vrcp.pop %v899
    %v1002 = vmul.f32 1.0, %v1001
    %v1003 = vrcp.pop %v900
    %v1004 = vmul.f32 1.0, %v1003
    %v1005 = vrcp.pop %v901
    %v1006 = vmul.f32 1.0, %v1005
    %v1007 = vrcp.pop %v902
    %v1008 = vmul.f32 1.0, %v1007
    %v1009 = vrcp.pop %v903
    %v1010 = vmul.f32 1.0, %v1009
    %v1011 = vrcp.pop %v904
    %v1012 = vmul.f32 1.0, %v1011
    %v1013 = vrcp.pop %v905
    %v1014 = vmul.f32 1.0, %v1013
    %v1015 = vrcp.pop %v906
    %v1016 = vmul.f32 1.0, %v1015
    %v1017 = vrcp.pop %v907
    %v1018 = vmul.f32 1.0, %v1017
    %v1019 = vrcp.pop %v908
    %v1020 = vmul.f32 1.0, %v1019
    %v1021 = vrcp.pop %v909
    %v1022 = vmul.f32 1.0, %v1021
    %v1023 = vrcp.pop %v910
    %v1024 = vmul.f32 1.0, %v1023
    %v1025 = vrcp.pop %v911
    %v1026 = vmul.f32 1.0, %v1025
    %v1027 = vrcp.pop %v912
    %v1028 = vmul.f32 1.0, %v1027
    %v1029 = vrcp.pop %v913
    %v1030 = vmul.f32 1.0, %v1029
    %v1031 = vrcp.pop %v914
    %v1032 = vmul.f32 1.0, %v1031
    %v1033 = vrcp.pop %v915
    %v1034 = vmul.f32 1.0, %v1033
    %v1035 = vrcp.pop %v916
    %v1036 = vmul.f32 1.0, %v1035
    %v1037 = vrcp.pop %v917
    %v1038 = vmul.f32 1.0, %v1037
    %v1039 = vrcp.pop %v918
    %v1040 = vmul.f32 1.0, %v1039
    %v1041 = vrcp.pop %v919
    %v1042 = vmul.f32 1.0, %v1041
    %v1043 = vrcp.pop %v920
    %v1044 = vmul.f32 1.0, %v1043
    %v1045 = vrcp.pop %v921
    %v1046 = vmul.f32 1.0, %v1045
    %v1047 = vrcp.pop %v922
    %v1048 = vmul.f32 1.0, %v1047
    %v1049 = vrcp.pop %v923
    %v1050 = vmul.f32 1.0, %v1049
    %v1051 = vrcp.pop %v924
    %v1052 = vmul.f32 1.0, %v1051
    %v1053 = vmul.f32 %v351, %v926
    %v1054 = vmul.f32 %v356, %v928
    %v1055 = vmul.f32 %v361, %v930
    %v1056 = vmul.f32 %v366, %v932
    %v1057 = vmul.f32 %v371, %v934
    %v1058 = vmul.f32 %v376, %v936
    %v1059 = vmul.f32 %v381, %v938
    %v1060 = vmul.f32 %v386, %v940
    %v1061 = vmul.f32 %v391, %v942
    %v1062 = vmul.f32 %v396, %v944
    %v1063 = vmul.f32 %v401, %v946
    %v1064 = vmul.f32 %v406, %v948
    %v1065 = vmul.f32 %v411, %v950
    %v1066 = vmul.f32 %v416, %v952
    %v1067 = vmul.f32 %v421, %v954
    %v1068 = vmul.f32 %v426, %v956
    %v1069 = vmul.f32 %v431, %v958
    %v1070 = vmul.f32 %v436, %v960
    %v1071 = vmul.f32 %v441, %v962
    %v1072 = vmul.f32 %v446, %v964
    %v1073 = vmul.f32 %v451, %v966
    %v1074 = vmul.f32 %v456, %v968
    %v1075 = vmul.f32 %v461, %v970
    %v1076 = vmul.f32 %v466, %v972
    %v1077 = vmul.f32 %v471, %v974
    %v1078 = vmul.f32 %v476, %v976
    %v1079 = vmul.f32 %v481, %v978
    %v1080 = vmul.f32 %v486, %v980
    %v1081 = vmul.f32 %v491, %v982
    %v1082 = vmul.f32 %v496, %v984
    %v1083 = vmul.f32 %v501, %v986
    %v1084 = vmul.f32 %v506, %v988
    %v1085 = vmul.f32 %v511, %v990
    %v1086 = vmul.f32 %v516, %v992
    %v1087 = vmul.f32 %v521, %v994
    %v1088 = vmul.f32 %v526, %v996
    %v1089 = vmul.f32 %v531, %v998
    %v1090 = vmul.f32 %v536, %v1000
    %v1091 = vmul.f32 %v541, %v1002
    %v1092 = vmul.f32 %v546, %v1004
    %v1093 = vmul.f32 %v551, %v1006
    %v1094 = vmul.f32 %v556, %v1008
    %v1095 = vmul.f32 %v561, %v1010
    %v1096 = vmul.f32 %v566, %v1012
    %v1097 = vmul.f32 %v571, %v1014
    %v1098 = vmul.f32 %v576, %v1016
    %v1099 = vmul.f32 %v581, %v1018
    %v1100 = vmul.f32 %v586, %v1020
    %v1101 = vmul.f32 %v591, %v1022
    %v1102 = vmul.f32 %v596, %v1024
    %v1103 = vmul.f32 %v601, %v1026
    %v1104 = vmul.f32 %v606, %v1028
    %v1105 = vmul.f32 %v611, %v1030
    %v1106 = vmul.f32 %v616, %v1032
    %v1107 = vmul.f32 %v621, %v1034
    %v1108 = vmul.f32 %v626, %v1036
    %v1109 = vmul.f32 %v631, %v1038
    %v1110 = vmul.f32 %v636, %v1040
    %v1111 = vmul.f32 %v641, %v1042
    %v1112 = vmul.f32 %v646, %v1044
    %v1113 = vmul.f32 %v651, %v1046
    %v1114 = vmul.f32 %v656, %v1048
    %v1115 = vmul.f32 %v661, %v1050
    %v1116 = vmul.f32 %v666, %v1052
    %1117 = vst [vmem:[#allocation2] sm:$0xff] %v1053
    %1118 = vst [vmem:[#allocation2 + $0x8] sm:$0xff] %v1054
    %1119 = vst [vmem:[#allocation2 + $0x10] sm:$0xff] %v1055
    %1120 = vst [vmem:[#allocation2 + $0x18] sm:$0xff] %v1056
    %1121 = vst [vmem:[#allocation2 + $0x20] sm:$0xff] %v1057
    %1122 = vst [vmem:[#allocation2 + $0x28] sm:$0xff] %v1058
    %1123 = vst [vmem:[#allocation2 + $0x30] sm:$0xff] %v1059
    %1124 = vst [vmem:[#allocation2 + $0x38] sm:$0xff] %v1060
    %1125 = vst [vmem:[#allocation2 + $0x40] sm:$0xff] %v1061
    %1126 = vst [vmem:[#allocation2 + $0x48] sm:$0xff] %v1062
    %1127 = vst [vmem:[#allocation2 + $0x50] sm:$0xff] %v1063
    %1128 = vst [vmem:[#allocation2 + $0x58] sm:$0xff] %v1064
    %1129 = vst [vmem:[#allocation2 + $0x60] sm:$0xff] %v1065
    %1130 = vst [vmem:[#allocation2 + $0x68] sm:$0xff] %v1066
    %1131 = vst [vmem:[#allocation2 + $0x70] sm:$0xff] %v1067
    %1132 = vst [vmem:[#allocation2 + $0x78] sm:$0xff] %v1068
    %1133 = vst [vmem:[#allocation2 + $0x80] sm:$0xff] %v1069
    %1134 = vst [vmem:[#allocation2 + $0x88] sm:$0xff] %v1070
    %1135 = vst [vmem:[#allocation2 + $0x90] sm:$0xff] %v1071
    %1136 = vst [vmem:[#allocation2 + $0x98] sm:$0xff] %v1072
    %1137 = vst [vmem:[#allocation2 + $0xa0] sm:$0xff] %v1073
    %1138 = vst [vmem:[#allocation2 + $0xa8] sm:$0xff] %v1074
    %1139 = vst [vmem:[#allocation2 + $0xb0] sm:$0xff] %v1075
    %1140 = vst [vmem:[#allocation2 + $0xb8] sm:$0xff] %v1076
    %1141 = vst [vmem:[#allocation2 + $0xc0] sm:$0xff] %v1077
    %1142 = vst [vmem:[#allocation2 + $0xc8] sm:$0xff] %v1078
    %1143 = vst [vmem:[#allocation2 + $0xd0] sm:$0xff] %v1079
    %1144 = vst [vmem:[#allocation2 + $0xd8] sm:$0xff] %v1080
    %1145 = vst [vmem:[#allocation2 + $0xe0] sm:$0xff] %v1081
    %1146 = vst [vmem:[#allocation2 + $0xe8] sm:$0xff] %v1082
    %1147 = vst [vmem:[#allocation2 + $0xf0] sm:$0xff] %v1083
    %1148 = vst [vmem:[#allocation2 + $0xf8] sm:$0xff] %v1084
    %1149 = vst [vmem:[#allocation2 + $0x100] sm:$0xff] %v1085
    %1150 = vst [vmem:[#allocation2 + $0x108] sm:$0xff] %v1086
    %1151 = vst [vmem:[#allocation2 + $0x110] sm:$0xff] %v1087
    %1152 = vst [vmem:[#allocation2 + $0x118] sm:$0xff] %v1088
    %1153 = vst [vmem:[#allocation2 + $0x120] sm:$0xff] %v1089
    %1154 = vst [vmem:[#allocation2 + $0x128] sm:$0xff] %v1090
    %1155 = vst [vmem:[#allocation2 + $0x130] sm:$0xff] %v1091
    %1156 = vst [vmem:[#allocation2 + $0x138] sm:$0xff] %v1092
    %1157 = vst [vmem:[#allocation2 + $0x140] sm:$0xff] %v1093
    %1158 = vst [vmem:[#allocation2 + $0x148] sm:$0xff] %v1094
    %1159 = vst [vmem:[#allocation2 + $0x150] sm:$0xff] %v1095
    %1160 = vst [vmem:[#allocation2 + $0x158] sm:$0xff] %v1096
    %1161 = vst [vmem:[#allocation2 + $0x160] sm:$0xff] %v1097
    %1162 = vst [vmem:[#allocation2 + $0x168] sm:$0xff] %v1098
    %1163 = vst [vmem:[#allocation2 + $0x170] sm:$0xff] %v1099
    %1164 = vst [vmem:[#allocation2 + $0x178] sm:$0xff] %v1100
    %1165 = vst [vmem:[#allocation2 + $0x180] sm:$0xff] %v1101
    %1166 = vst [vmem:[#allocation2 + $0x188] sm:$0xff] %v1102
    %1167 = vst [vmem:[#allocation2 + $0x190] sm:$0xff] %v1103
    %1168 = vst [vmem:[#allocation2 + $0x198] sm:$0xff] %v1104
    %1169 = vst [vmem:[#allocation2 + $0x1a0] sm:$0xff] %v1105
    %1170 = vst [vmem:[#allocation2 + $0x1a8] sm:$0xff] %v1106
    %1171 = vst [vmem:[#allocation2 + $0x1b0] sm:$0xff] %v1107
    %1172 = vst [vmem:[#allocation2 + $0x1b8] sm:$0xff] %v1108
    %1173 = vst [vmem:[#allocation2 + $0x1c0] sm:$0xff] %v1109
    %1174 = vst [vmem:[#allocation2 + $0x1c8] sm:$0xff] %v1110
    %1175 = vst [vmem:[#allocation2 + $0x1d0] sm:$0xff] %v1111
    %1176 = vst [vmem:[#allocation2 + $0x1d8] sm:$0xff] %v1112
    %1177 = vst [vmem:[#allocation2 + $0x1e0] sm:$0xff] %v1113
    %1178 = vst [vmem:[#allocation2 + $0x1e8] sm:$0xff] %v1114
    %1179 = vst [vmem:[#allocation2 + $0x1f0] sm:$0xff] %v1115
    %1180 = vst [vmem:[#allocation2 + $0x1f8] sm:$0xff] %v1116
    // Predicated region
    $region14: #{tpu_custom_call.1} parent=1 // pred_check
      _
    $region15: #{tpu_custom_call.1} parent=1 // pred_check_branch
      %1182 = sbr.rel (0) target = $region17
    $region16: #{tpu_custom_call.1} parent=1 // pred_region
      %s1184 = ssub.s32 8192, 8192
      %1185 = vsyncadd [#allocation3], %s1184
      %s1186 = sshll.u32 [#allocation2], 4
      %s1187 = int_to_ptr.vmem [resolvable:$true] %s1186
      %1192 = dma.vmem_to_hbm [thread:$0]  %s1187, 8192, %s3, [#allocation3], 128, 128, 8
    $region17: #{tpu_custom_call.1} parent=1 // pred_fallthru
      _
    // Predicated region
    $region18: #{tpu_custom_call.1} parent=1 // pred_check
      _
    $region19: #{tpu_custom_call.1} parent=1 // pred_check_branch
      %1194 = sbr.rel (0) target = $region21
    $region20: #{tpu_custom_call.1} parent=1 // pred_region
      %1195 = dma.done [#allocation3], 8192
    $region21: #{tpu_custom_call.1} parent=1 // pred_fallthru
      _
    %1196 = vsyncpa [#allocation3], 1

</llo_original>
